<compile_context>
chip_gen: v6e
topology: v6e:2x2x1
jax: 0.10.0
libtpu: 0.0.40
codegen_flags: <defaults>
</compile_context>

<pallas_src>
import functools

import jax
import jax.numpy as jnp
import numpy as np
from jax.experimental import pallas as pl
from jax.experimental.pallas import tpu as pltpu


def _compressed_dist_kernel(
    x_ref, w1_ref, b1_ref, w2_ref, b2_ref, wms_ref, bms_ref, noise_ref,
    samples_ref, mean_ref, std_ref, *, dout,
):
    # ---- MLP + heads: computed once per batch tile (grid is batch-only) ----
    x = x_ref[...]                                                     # [TB, Din]

    h1 = jnp.dot(x, w1_ref[...], preferred_element_type=jnp.float32) + b1_ref[...]
    h1 = jnp.maximum(h1, 0.0)                                          # [TB, H]

    h2 = jnp.dot(h1, w2_ref[...], preferred_element_type=jnp.float32) + b2_ref[...]
    h2 = jnp.maximum(h2, 0.0)                                          # [TB, Dout]

    # Fused mean|std head: one MXU issue into [TB, 2*Dout], then static slices.
    ms = jnp.dot(h2, wms_ref[...], preferred_element_type=jnp.float32) + bms_ref[...]
    mean = ms[:, :dout]                                                # [TB, Dout]
    std_lin = ms[:, dout:]                                             # [TB, Dout]
    std = std_lin * std_lin + 1e-8

    mean_ref[...] = mean.astype(mean_ref.dtype)
    std_ref[...] = std.astype(std_ref.dtype)

    # ---- Reparameterised samples, written directly in [B, S, Dout] layout ----
    noise = noise_ref[...]                                             # [TB, S, Dout]
    samples = std[:, None, :] * noise + mean[:, None, :]               # [TB, S, Dout]
    samples_ref[...] = samples.astype(samples_ref.dtype)


def compressed_dist_pallas(reps, params, noise, *, max_tile_b=512):
    """reps: [B, Din] f32, noise: [B, S, Dout] f32 (final sample layout).

    Returns (samples [B, S, Dout], (mean [B, Dout], std [B, Dout])).
    """
    w1, b1, w2, b2, wm, bm, ws, bs = params
    B, din = reps.shape
    _, S, dout = noise.shape
    hidden = w1.shape[1]

    # Fuse the mean/std heads into one matmul (halves MXU issues, one store).
    wms = jnp.concatenate([wm, ws], axis=1)          # [Dout, 2*Dout]
    bms = jnp.concatenate([bm, bs], axis=1)          # [1, 2*Dout]

    # Batch tile: as big as reasonable; keep sublane (x8) alignment when tiling.
    if B <= max_tile_b:
        tile_b = B                                   # full dim -> always legal
    else:
        tile_b = max(8, (max_tile_b // 8) * 8)       # multiple of 8
    grid = (pl.cdiv(B, tile_b),)

    # Per-step VMEM footprint (double-buffered streaming blocks + resident weights).
    block_bytes = 4 * (
        2 * (tile_b * din + tile_b * S * dout)                   # reps + noise in
        + 2 * (tile_b * S * dout + 2 * tile_b * dout)            # samples + mean + std out
        + (din * hidden + hidden + hidden * dout + dout
           + 2 * dout * dout + 2 * dout)                          # resident weights
    )
    # Safe on every generation: below v7x's 64 MiB physical VMEM, above the
    # 16/32 MiB scoped defaults on v5e/v6e so big tiles don't OOM at compile.
    vmem_limit = int(min(48 * 1024 * 1024, max(16 * 1024 * 1024, 2 * block_bytes)))

    flops = int(2 * B * (din * hidden + hidden * dout + 2 * dout * dout)
                + 2 * B * S * dout)
    bytes_accessed = int(4 * (
        B * din + B * S * dout                                    # inputs streamed
        + din * hidden + hidden + hidden * dout + dout
        + 2 * dout * dout + 2 * dout                              # weights (once)
        + B * S * dout + 2 * B * dout                             # outputs
    ))

    kernel = functools.partial(_compressed_dist_kernel, dout=dout)

    samples, mean, std = pl.pallas_call(
        kernel,
        grid=grid,
        in_specs=[
            pl.BlockSpec((tile_b, din), lambda b: (b, 0)),          # reps (streamed)
            pl.BlockSpec((din, hidden), lambda b: (0, 0)),          # w1 (resident)
            pl.BlockSpec((1, hidden), lambda b: (0, 0)),            # b1
            pl.BlockSpec((hidden, dout), lambda b: (0, 0)),         # w2
            pl.BlockSpec((1, dout), lambda b: (0, 0)),              # b2
            pl.BlockSpec((dout, 2 * dout), lambda b: (0, 0)),       # wm|ws fused
            pl.BlockSpec((1, 2 * dout), lambda b: (0, 0)),          # bm|bs fused
            pl.BlockSpec((tile_b, S, dout), lambda b: (b, 0, 0)),   # noise (streamed)
        ],
        out_specs=(
            pl.BlockSpec((tile_b, S, dout), lambda b: (b, 0, 0)),   # samples [B,S,Dout]
            pl.BlockSpec((tile_b, dout), lambda b: (b, 0)),         # mean
            pl.BlockSpec((tile_b, dout), lambda b: (b, 0)),         # std
        ),
        out_shape=(
            jax.ShapeDtypeStruct((B, S, dout), jnp.float32),
            jax.ShapeDtypeStruct((B, dout), jnp.float32),
            jax.ShapeDtypeStruct((B, dout), jnp.float32),
        ),
        compiler_params=pltpu.CompilerParams(
            dimension_semantics=("parallel",),       # megacore split on v7x
            vmem_limit_bytes=vmem_limit,
        ),
        cost_estimate=pl.CostEstimate(
            flops=flops, transcendentals=0, bytes_accessed=bytes_accessed),
    )(reps, w1, b1, w2, b2, wms, bms, noise)

    return samples, (mean, std)


def compressed_dist_forward(reps, params, key, n_samples=1):
    """Mirror of CompressedDist.forward: draws the noise internally.

    The noise is drawn directly in [B, n_samples, Dout] layout — i.i.d. N(0,1),
    hence distributionally identical to torch.randn(n_samples, B, Dout)
    followed by the .transpose(0, 1) of the reference forward — so the kernel
    writes `samples` in its final layout with no extra HBM transpose pass.
    """
    B = reps.shape[0]
    dout = params[4].shape[1]
    noise = jax.random.normal(key, (B, n_samples, dout), jnp.float32)
    return compressed_dist_pallas(reps, params, noise)


def init_params(key, input_dim, output_dim):
    hidden_dim = (input_dim + output_dim) // 2
    ks = jax.random.split(key, 8)

    def lin(kw, kb, fan_in, fan_out):
        bound = 1.0 / np.sqrt(fan_in)
        w = jax.random.uniform(kw, (fan_in, fan_out), jnp.float32, -bound, bound)
        b = jax.random.uniform(kb, (1, fan_out), jnp.float32, -bound, bound)
        return w, b

    w1, b1 = lin(ks[0], ks[1], input_dim, hidden_dim)
    w2, b2 = lin(ks[2], ks[3], hidden_dim, output_dim)
    wm, bm = lin(ks[4], ks[5], output_dim, output_dim)
    ws, bs = lin(ks[6], ks[7], output_dim, output_dim)
    return (w1, b1, w2, b2, wm, bm, ws, bs)


def reference_forward(reps, params, noise_sbd):
    """Literal transcription of the PyTorch forward (noise in [S, B, Dout])."""
    w1, b1, w2, b2, wm, bm, ws, bs = params
    h = jnp.maximum(reps @ w1 + b1, 0.0)
    h = jnp.maximum(h @ w2 + b2, 0.0)
    mean = h @ wm + bm
    std = (h @ ws + bs) ** 2 + 1e-8
    samples = std[None] * noise_sbd + mean[None]          # [S, B, Dout]
    return jnp.transpose(samples, (1, 0, 2)), (mean, std)


if __name__ == "__main__":
    input_dim, output_dim = 32, 16
    batch, n_samples = 8, 2

    key = jax.random.PRNGKey(0)
    k_params, k_reps, k_noise, k_fwd = jax.random.split(key, 4)

    params = init_params(k_params, input_dim, output_dim)
    reps = jax.random.normal(k_reps, (batch, input_dim), jnp.float32)

    # Noise drawn in the kernel's [B, S, Dout] layout; the reference consumes
    # the [S, B, Dout] (torch) view of the exact same values.
    noise_bsd = jax.random.normal(k_noise, (batch, n_samples, output_dim), jnp.float32)
    noise_sbd = jnp.transpose(noise_bsd, (1, 0, 2))

    samples, (mean, std) = compressed_dist_pallas(reps, params, noise_bsd)
    jax.block_until_ready((samples, mean, std))

    # Bit-exact correctness vs. the literal (torch-layout) reference.
    ref_samples, (ref_mean, ref_std) = reference_forward(reps, params, noise_sbd)
    np.testing.assert_allclose(np.asarray(samples), np.asarray(ref_samples),
                               rtol=1e-5, atol=1e-5)
    np.testing.assert_allclose(np.asarray(mean), np.asarray(ref_mean),
                               rtol=1e-5, atol=1e-5)
    np.testing.assert_allclose(np.asarray(std), np.asarray(ref_std),
                               rtol=1e-5, atol=1e-5)

    assert samples.shape == (batch, n_samples, output_dim)
    assert mean.shape == (batch, output_dim) and std.shape == (batch, output_dim)

    # Module-style entry point (internally drawn noise): shape/finiteness check.
    s2, (m2, d2) = compressed_dist_forward(reps, params, k_fwd, n_samples=n_samples)
    jax.block_until_ready((s2, m2, d2))
    assert s2.shape == (batch, n_samples, output_dim)
    assert bool(jnp.all(jnp.isfinite(s2))) and bool(jnp.all(d2 > 0.0))

    print("KERNEL_OK")
</pallas_src>

<mosaic_0001>
module attributes {stable_mosaic.version = 11 : i64} {
  func.func @_compressed_dist_kernel(%arg0: i32, %arg1: memref<8x32xf32, #tpu.memory_space<vmem>>, %arg2: memref<32x24xf32, #tpu.memory_space<vmem>>, %arg3: memref<1x24xf32, #tpu.memory_space<vmem>>, %arg4: memref<24x16xf32, #tpu.memory_space<vmem>>, %arg5: memref<1x16xf32, #tpu.memory_space<vmem>>, %arg6: memref<16x32xf32, #tpu.memory_space<vmem>>, %arg7: memref<1x32xf32, #tpu.memory_space<vmem>>, %arg8: memref<8x2x16xf32, #tpu.memory_space<vmem>>, %arg9: memref<8x2x16xf32, #tpu.memory_space<vmem>>, %arg10: memref<8x16xf32, #tpu.memory_space<vmem>>, %arg11: memref<8x16xf32, #tpu.memory_space<vmem>>) attributes {dimension_semantics = [#tpu.dimension_semantics<parallel>], iteration_bounds = array<i64: 1>, scalar_prefetch = 0 : i64, scratch_operands = 0 : i64, tpu.core_type = #tpu.core_type<tc>, window_params = [{transform_indices = @transform_0, window_bounds = array<i64: 8, 32>}, {pipeline_mode = #tpu.pipeline_mode<synchronous>, transform_indices = @transform_1, window_bounds = array<i64: 32, 24>}, {pipeline_mode = #tpu.pipeline_mode<synchronous>, transform_indices = @transform_2, window_bounds = array<i64: 1, 24>}, {pipeline_mode = #tpu.pipeline_mode<synchronous>, transform_indices = @transform_3, window_bounds = array<i64: 24, 16>}, {pipeline_mode = #tpu.pipeline_mode<synchronous>, transform_indices = @transform_4, window_bounds = array<i64: 1, 16>}, {pipeline_mode = #tpu.pipeline_mode<synchronous>, transform_indices = @transform_5, window_bounds = array<i64: 16, 32>}, {pipeline_mode = #tpu.pipeline_mode<synchronous>, transform_indices = @transform_6, window_bounds = array<i64: 1, 32>}, {transform_indices = @transform_7, window_bounds = array<i64: 8, 2, 16>}, {transform_indices = @transform_8, window_bounds = array<i64: 8, 2, 16>}, {transform_indices = @transform_9, window_bounds = array<i64: 8, 16>}, {transform_indices = @transform_10, window_bounds = array<i64: 8, 16>}]} {
    %c0 = arith.constant 0 : index
    %c0_0 = arith.constant 0 : index
    %0 = vector.load %arg1[%c0, %c0_0] : memref<8x32xf32, #tpu.memory_space<vmem>>, vector<8x32xf32>
    %c0_1 = arith.constant 0 : index
    %c0_2 = arith.constant 0 : index
    %1 = vector.load %arg2[%c0_1, %c0_2] : memref<32x24xf32, #tpu.memory_space<vmem>>, vector<32x24xf32>
    %cst = arith.constant dense<0.000000e+00> : vector<8x24xf32>
    %2 = tpu.matmul %0, %1, %cst {dimension_numbers = #tpu.dot_dimension_numbers<[1], [0], [0], [1], [0, 0, 1, 1], [], []>} : vector<8x32xf32>, vector<32x24xf32>, vector<8x24xf32> -> vector<8x24xf32>
    %c0_3 = arith.constant 0 : index
    %c0_4 = arith.constant 0 : index
    %3 = vector.load %arg3[%c0_3, %c0_4] : memref<1x24xf32, #tpu.memory_space<vmem>>, vector<1x24xf32>
    %4 = vector.broadcast %3 : vector<1x24xf32> to vector<8x24xf32>
    %5 = arith.addf %2, %4 : vector<8x24xf32>
    %cst_5 = arith.constant 0.000000e+00 : f32
    %6 = vector.broadcast %cst_5 : f32 to vector<8x24xf32>
    %7 = arith.maximumf %5, %6 : vector<8x24xf32>
    %c0_6 = arith.constant 0 : index
    %c0_7 = arith.constant 0 : index
    %8 = vector.load %arg4[%c0_6, %c0_7] : memref<24x16xf32, #tpu.memory_space<vmem>>, vector<24x16xf32>
    %cst_8 = arith.constant dense<0.000000e+00> : vector<8x16xf32>
    %9 = tpu.matmul %7, %8, %cst_8 {dimension_numbers = #tpu.dot_dimension_numbers<[1], [0], [0], [1], [0, 0, 1, 1], [], []>} : vector<8x24xf32>, vector<24x16xf32>, vector<8x16xf32> -> vector<8x16xf32>
    %c0_9 = arith.constant 0 : index
    %c0_10 = arith.constant 0 : index
    %10 = vector.load %arg5[%c0_9, %c0_10] : memref<1x16xf32, #tpu.memory_space<vmem>>, vector<1x16xf32>
    %11 = vector.broadcast %10 : vector<1x16xf32> to vector<8x16xf32>
    %12 = arith.addf %9, %11 : vector<8x16xf32>
    %cst_11 = arith.constant 0.000000e+00 : f32
    %13 = vector.broadcast %cst_11 : f32 to vector<8x16xf32>
    %14 = arith.maximumf %12, %13 : vector<8x16xf32>
    %c0_12 = arith.constant 0 : index
    %c0_13 = arith.constant 0 : index
    %15 = vector.load %arg6[%c0_12, %c0_13] : memref<16x32xf32, #tpu.memory_space<vmem>>, vector<16x32xf32>
    %cst_14 = arith.constant dense<0.000000e+00> : vector<8x32xf32>
    %16 = tpu.matmul %14, %15, %cst_14 {dimension_numbers = #tpu.dot_dimension_numbers<[1], [0], [0], [1], [0, 0, 1, 1], [], []>} : vector<8x16xf32>, vector<16x32xf32>, vector<8x32xf32> -> vector<8x32xf32>
    %c0_15 = arith.constant 0 : index
    %c0_16 = arith.constant 0 : index
    %17 = vector.load %arg7[%c0_15, %c0_16] : memref<1x32xf32, #tpu.memory_space<vmem>>, vector<1x32xf32>
    %18 = vector.broadcast %17 : vector<1x32xf32> to vector<8x32xf32>
    %19 = arith.addf %16, %18 : vector<8x32xf32>
    %20 = vector.extract_strided_slice %19 {offsets = [0, 0], sizes = [8, 16], strides = [1, 1]} : vector<8x32xf32> to vector<8x16xf32>
    %21 = vector.extract_strided_slice %19 {offsets = [0, 16], sizes = [8, 16], strides = [1, 1]} : vector<8x32xf32> to vector<8x16xf32>
    %22 = arith.mulf %21, %21 : vector<8x16xf32>
    %cst_17 = arith.constant 9.99999993E-9 : f32
    %23 = vector.broadcast %cst_17 : f32 to vector<8x16xf32>
    %24 = arith.addf %22, %23 : vector<8x16xf32>
    %c0_18 = arith.constant 0 : index
    %c0_19 = arith.constant 0 : index
    %25 = vector.load %arg10[%c0_18, %c0_19] : memref<8x16xf32, #tpu.memory_space<vmem>>, vector<8x16xf32>
    tpu.vector_store %arg10[%c0_18, %c0_19], %20 {strides = array<i32>} : memref<8x16xf32, #tpu.memory_space<vmem>>, vector<8x16xf32>,
    %c0_20 = arith.constant 0 : index
    %c0_21 = arith.constant 0 : index
    %26 = vector.load %arg11[%c0_20, %c0_21] : memref<8x16xf32, #tpu.memory_space<vmem>>, vector<8x16xf32>
    tpu.vector_store %arg11[%c0_20, %c0_21], %24 {strides = array<i32>} : memref<8x16xf32, #tpu.memory_space<vmem>>, vector<8x16xf32>,
    %c0_22 = arith.constant 0 : index
    %c0_23 = arith.constant 0 : index
    %c0_24 = arith.constant 0 : index
    %27 = vector.load %arg8[%c0_22, %c0_23, %c0_24] : memref<8x2x16xf32, #tpu.memory_space<vmem>>, vector<8x2x16xf32>
    %28 = vector.shape_cast %24 : vector<8x16xf32> to vector<8x1x16xf32>
    %29 = vector.broadcast %28 : vector<8x1x16xf32> to vector<8x2x16xf32>
    %30 = arith.mulf %29, %27 : vector<8x2x16xf32>
    %31 = vector.shape_cast %20 : vector<8x16xf32> to vector<8x1x16xf32>
    %32 = vector.broadcast %31 : vector<8x1x16xf32> to vector<8x2x16xf32>
    %33 = arith.addf %30, %32 : vector<8x2x16xf32>
    %c0_25 = arith.constant 0 : index
    %c0_26 = arith.constant 0 : index
    %c0_27 = arith.constant 0 : index
    %34 = vector.load %arg9[%c0_25, %c0_26, %c0_27] : memref<8x2x16xf32, #tpu.memory_space<vmem>>, vector<8x2x16xf32>
    tpu.vector_store %arg9[%c0_25, %c0_26, %c0_27], %33 {strides = array<i32>} : memref<8x2x16xf32, #tpu.memory_space<vmem>>, vector<8x2x16xf32>,
    return
  }
  func.func @transform_0(%arg0: i32) -> (i32, i32) {
    %c0_i32 = arith.constant 0 : i32
    %c0_i32_0 = arith.constant 0 : i32
    return %arg0, %c0_i32 : i32, i32
  }
  func.func @transform_1(%arg0: i32) -> (i32, i32) {
    %c0_i32 = arith.constant 0 : i32
    %c0_i32_0 = arith.constant 0 : i32
    %c0_i32_1 = arith.constant 0 : i32
    return %c0_i32, %c0_i32_0 : i32, i32
  }
  func.func @transform_2(%arg0: i32) -> (i32, i32) {
    %c0_i32 = arith.constant 0 : i32
    %c0_i32_0 = arith.constant 0 : i32
    %c0_i32_1 = arith.constant 0 : i32
    return %c0_i32, %c0_i32_0 : i32, i32
  }
  func.func @transform_3(%arg0: i32) -> (i32, i32) {
    %c0_i32 = arith.constant 0 : i32
    %c0_i32_0 = arith.constant 0 : i32
    %c0_i32_1 = arith.constant 0 : i32
    return %c0_i32, %c0_i32_0 : i32, i32
  }
  func.func @transform_4(%arg0: i32) -> (i32, i32) {
    %c0_i32 = arith.constant 0 : i32
    %c0_i32_0 = arith.constant 0 : i32
    %c0_i32_1 = arith.constant 0 : i32
    return %c0_i32, %c0_i32_0 : i32, i32
  }
  func.func @transform_5(%arg0: i32) -> (i32, i32) {
    %c0_i32 = arith.constant 0 : i32
    %c0_i32_0 = arith.constant 0 : i32
    %c0_i32_1 = arith.constant 0 : i32
    return %c0_i32, %c0_i32_0 : i32, i32
  }
  func.func @transform_6(%arg0: i32) -> (i32, i32) {
    %c0_i32 = arith.constant 0 : i32
    %c0_i32_0 = arith.constant 0 : i32
    %c0_i32_1 = arith.constant 0 : i32
    return %c0_i32, %c0_i32_0 : i32, i32
  }
  func.func @transform_7(%arg0: i32) -> (i32, i32, i32) {
    %c0_i32 = arith.constant 0 : i32
    %c0_i32_0 = arith.constant 0 : i32
    %c0_i32_1 = arith.constant 0 : i32
    return %arg0, %c0_i32, %c0_i32_0 : i32, i32, i32
  }
  func.func @transform_8(%arg0: i32) -> (i32, i32, i32) {
    %c0_i32 = arith.constant 0 : i32
    %c0_i32_0 = arith.constant 0 : i32
    %c0_i32_1 = arith.constant 0 : i32
    return %arg0, %c0_i32, %c0_i32_0 : i32, i32, i32
  }
  func.func @transform_9(%arg0: i32) -> (i32, i32) {
    %c0_i32 = arith.constant 0 : i32
    %c0_i32_0 = arith.constant 0 : i32
    return %arg0, %c0_i32 : i32, i32
  }
  func.func @transform_10(%arg0: i32) -> (i32, i32) {
    %c0_i32 = arith.constant 0 : i32
    %c0_i32_0 = arith.constant 0 : i32
    return %arg0, %c0_i32 : i32, i32
  }
}

</mosaic_0001>

<llo_original>
// kernel: tpu_custom_call.1
$region0: #{tpu_custom_call.1}
  #allocation0 [shape = 'u32[]', space=smem, size = 0x4, offset = 0x4, fixed_abs, tag = 'smem constant byte address 0x4 - core index']
  #allocation1 [shape = 'u32[144,128]{1,0:T(1,128)}', space=vmem, size = 0x12000, scoped, tag = 'internal scratch']
  %s0 = inlined_call_operand.vmem [shape: f32[8,32], index: 0, kind: input, shape index: {}]
  %s1 = inlined_call_operand.vmem [shape: f32[32,24], index: 1, kind: input, shape index: {}]
  %s2 = inlined_call_operand.vmem [shape: f32[1,24], index: 2, kind: input, shape index: {}]
  %s3 = inlined_call_operand.vmem [shape: f32[24,16], index: 3, kind: input, shape index: {}]
  %s4 = inlined_call_operand.vmem [shape: f32[1,16], index: 4, kind: input, shape index: {}]
  %s5 = inlined_call_operand.vmem [shape: f32[16,32], index: 5, kind: input, shape index: {}]
  %s6 = inlined_call_operand.vmem [shape: f32[1,32], index: 6, kind: input, shape index: {}]
  %s7 = inlined_call_operand.vmem [shape: f32[8,2,16], index: 7, kind: input, shape index: {}]
  %s8 = inlined_call_operand.hbm [shape: f32[8,2,16], index: 8, kind: output, shape index: {0}]
  %s9 = inlined_call_operand.hbm [shape: f32[8,16], index: 9, kind: output, shape index: {1}]
  %s10 = inlined_call_operand.hbm [shape: f32[8,16], index: 10, kind: output, shape index: {2}]
  %11 = xla_tuple %s8, %s9, %s10
  %s12 = sld [smem:[#allocation0]]
  $region58: #{tpu_custom_call.1} parent=0
    _
  %s14 = ssub.s32 1, %s12
  %s15 = scalar_select 0, %s14, %s12
  $region1: #{tpu_custom_call.1} parent=0
    #allocation2 [shape = 'u8[8192]{0}', space=vmem, size = 0x2000, scoped, tag = 'output window, operand 0, single buffered']
    #allocation3 [shape = 's32[1]{0}', space=sflag, size = 0x4, scoped, tag = 'scoped memory for tpu_custom_call.1']
    #allocation4 [shape = 'u8[4096]{0}', space=vmem, size = 0x1000, scoped, tag = 'output window, operand 1, single buffered']
    #allocation5 [shape = 's32[1]{0}', space=sflag, size = 0x4, scoped, tag = 'scoped memory for tpu_custom_call.1']
    #allocation6 [shape = 'u8[4096]{0}', space=vmem, size = 0x1000, scoped, tag = 'output window, operand 2, single buffered']
    %16 = vsyncpa [#allocation3], 0
    %17 = vsyncpa [#allocation5], 0
    // Predicated region
    $region2: #{tpu_custom_call.1} parent=1 // pred_check
      _
    $region3: #{tpu_custom_call.1} parent=1 // pred_check_branch
      %19 = sbr.rel (0) target = $region5
    $region4: #{tpu_custom_call.1} parent=1 // pred_region
      _
    $region5: #{tpu_custom_call.1} parent=1 // pred_fallthru
      _
    // Predicated region
    $region6: #{tpu_custom_call.1} parent=1 // pred_check
      _
    $region7: #{tpu_custom_call.1} parent=1 // pred_check_branch
      %21 = sbr.rel (0) target = $region9
    $region8: #{tpu_custom_call.1} parent=1 // pred_region
      _
    $region9: #{tpu_custom_call.1} parent=1 // pred_fallthru
      _
    // Predicated region
    $region10: #{tpu_custom_call.1} parent=1 // pred_check
      _
    $region11: #{tpu_custom_call.1} parent=1 // pred_check_branch
      %23 = sbr.rel (0) target = $region13
    $region12: #{tpu_custom_call.1} parent=1 // pred_region
      _
    $region13: #{tpu_custom_call.1} parent=1 // pred_fallthru
      _
    // Predicated region
    $region14: #{tpu_custom_call.1} parent=1 // pred_check
      _
    $region15: #{tpu_custom_call.1} parent=1 // pred_check_branch
      %25 = sbr.rel (0) target = $region17
    $region16: #{tpu_custom_call.1} parent=1 // pred_region
      _
    $region17: #{tpu_custom_call.1} parent=1 // pred_fallthru
      _
    // Predicated region
    $region18: #{tpu_custom_call.1} parent=1 // pred_check
      _
    $region19: #{tpu_custom_call.1} parent=1 // pred_check_branch
      %27 = sbr.rel (0) target = $region21
    $region20: #{tpu_custom_call.1} parent=1 // pred_region
      _
    $region21: #{tpu_custom_call.1} parent=1 // pred_fallthru
      _
    // Predicated region
    $region22: #{tpu_custom_call.1} parent=1 // pred_check
      _
    $region23: #{tpu_custom_call.1} parent=1 // pred_check_branch
      %29 = sbr.rel (0) target = $region25
    $region24: #{tpu_custom_call.1} parent=1 // pred_region
      _
    $region25: #{tpu_custom_call.1} parent=1 // pred_fallthru
      _
    // Predicated region
    $region26: #{tpu_custom_call.1} parent=1 // pred_check
      _
    $region27: #{tpu_custom_call.1} parent=1 // pred_check_branch
      %31 = sbr.rel (0) target = $region29
    $region28: #{tpu_custom_call.1} parent=1 // pred_region
      _
    $region29: #{tpu_custom_call.1} parent=1 // pred_fallthru
      _
    // Predicated region
    $region30: #{tpu_custom_call.1} parent=1 // pred_check
      _
    $region31: #{tpu_custom_call.1} parent=1 // pred_check_branch
      %33 = sbr.rel (0) target = $region33
    $region32: #{tpu_custom_call.1} parent=1 // pred_region
      _
    $region33: #{tpu_custom_call.1} parent=1 // pred_fallthru
      _
    %v34 = vld [vmem:[%s0] sm:$0xff]
    %v35 = vld [vmem:[%s1] sm:$0xff]
    %v36 = vld [vmem:[%s1 + $0x8] sm:$0xff]
    %v37 = vld [vmem:[%s1 + $0x10] sm:$0xff]
    %v38 = vld [vmem:[%s1 + $0x18] sm:$0xff]
    %v39 = vld [vmem:[%s2] sm:$0x1]
    %v41 = vlaneseq
    %v42 = vshrl.u32 %v41, 7
    %v43 = vsub.s32 0, %v42
    %v44 = vrot.slane %v39, %v43
    %vm46 = vcmask 261120
    %v48 = vsel %vm46, %v34, 0
    %50 = vmatprep.subr.mxu0 0.0
    %51 = vmatpush1.msra.mxu0 0.0
    %52 = vmatprep.subr.mxu0 0.0
    %53 = vmatpush1.msra.mxu0 0.0
    %54 = vmatprep.subr.mxu0 0.0
    %55 = vmatpush1.msra.mxu0 0.0
    %56 = vmatprep.subr.mxu0 0.0
    %57 = vmatpush1.msra.mxu0 0.0
    %58 = vmatprep.subr.mxu0 0.0
    %59 = vmatpush1.msra.mxu0 0.0
    %60 = vmatprep.subr.mxu0 0.0
    %61 = vmatpush1.msra.mxu0 0.0
    %62 = vmatprep.subr.mxu0 0.0
    %63 = vmatpush1.msra.mxu0 0.0
    %64 = vmatprep.subr.mxu0 0.0
    %65 = vmatpush1.msra.mxu0 0.0
    %66 = vmatprep.subr.mxu0 0.0
    %67 = vmatpush1.msra.mxu0 0.0
    %68 = vmatprep.subr.mxu0 0.0
    %69 = vmatpush1.msra.mxu0 0.0
    %70 = vmatprep.subr.mxu0 0.0
    %71 = vmatpush1.msra.mxu0 0.0
    %72 = vmatprep.subr.mxu0 0.0
    %73 = vmatpush1.msra.mxu0 0.0
    %74 = vmatprep.subr.mxu0 0.0
    %75 = vmatpush1.msra.mxu0 %v38
    %76 = vmatprep.subr.mxu0 0.0
    %77 = vmatpush1.msra.mxu0 %v37
    %78 = vmatprep.subr.mxu0 0.0
    %79 = vmatpush1.msra.mxu0 %v36
    %80 = vmatprep.subr.mxu0 0.0
    %81 = vmatpush1.msra.mxu0 %v35
    %82 = vmatprep.subr.mxu0 0.0
    %83 = vmatpush2.msra.mxu0 0.0
    %84 = vmatprep.subr.mxu0 0.0
    %85 = vmatpush2.msra.mxu0 0.0
    %86 = vmatprep.subr.mxu0 0.0
    %87 = vmatpush2.msra.mxu0 0.0
    %88 = vmatprep.subr.mxu0 0.0
    %89 = vmatpush2.msra.mxu0 0.0
    %90 = vmatprep.subr.mxu0 0.0
    %91 = vmatpush2.msra.mxu0 0.0
    %92 = vmatprep.subr.mxu0 0.0
    %93 = vmatpush2.msra.mxu0 0.0
    %94 = vmatprep.subr.mxu0 0.0
    %95 = vmatpush2.msra.mxu0 0.0
    %96 = vmatprep.subr.mxu0 0.0
    %97 = vmatpush2.msra.mxu0 0.0
    %98 = vmatprep.subr.mxu0 0.0
    %99 = vmatpush2.msra.mxu0 0.0
    %100 = vmatprep.subr.mxu0 0.0
    %101 = vmatpush2.msra.mxu0 0.0
    %102 = vmatprep.subr.mxu0 0.0
    %103 = vmatpush2.msra.mxu0 0.0
    %104 = vmatprep.subr.mxu0 0.0
    %105 = vmatpush2.msra.mxu0 0.0
    %106 = vmatprep.subr.mxu0 0.0
    %107 = vmatpush2.msra.mxu0 0.0
    %108 = vmatprep.subr.mxu0 0.0
    %109 = vmatpush2.msra.mxu0 0.0
    %110 = vmatprep.subr.mxu0 0.0
    %111 = vmatpush2.msra.mxu0 0.0
    %112 = vmatprep.subr.mxu0 0.0
    %113 = vmatpush2.msra.mxu0 0.0
    %114 = vmatprep.mubr.f32.mxu0 0.0
    %115 = vmatmul.mubr.f32.gmra.mxu0 %v48
    %v116 = vpop.f32.mrf.mxu0
    %v117 = vadd.f32 %v44, %v116
    %v118 = vpop.f32.mrf.mxu0
    %119 = vdwg.mxu0
    %v120 = vmax.f32 %v117, 0.0
    %v121 = vld [vmem:[%s3] sm:$0xff]
    %v122 = vld [vmem:[%s3 + $0x8] sm:$0xff]
    %v123 = vld [vmem:[%s3 + $0x10] sm:$0xff]
    %v124 = vld [vmem:[%s4] sm:$0x1]
    %v126 = vlaneseq
    %v127 = vshrl.u32 %v126, 7
    %v128 = vsub.s32 0, %v127
    %v129 = vrot.slane %v124, %v128
    %vm131 = vcmask 195584
    %v133 = vsel %vm131, %v120, 0
    %135 = vmatprep.subr.mxu0 0.0
    %136 = vmatpush1.msra.mxu0 0.0
    %137 = vmatprep.subr.mxu0 0.0
    %138 = vmatpush1.msra.mxu0 0.0
    %139 = vmatprep.subr.mxu0 0.0
    %140 = vmatpush1.msra.mxu0 0.0
    %141 = vmatprep.subr.mxu0 0.0
    %142 = vmatpush1.msra.mxu0 0.0
    %143 = vmatprep.subr.mxu0 0.0
    %144 = vmatpush1.msra.mxu0 0.0
    %145 = vmatprep.subr.mxu0 0.0
    %146 = vmatpush1.msra.mxu0 0.0
    %147 = vmatprep.subr.mxu0 0.0
    %148 = vmatpush1.msra.mxu0 0.0
    %149 = vmatprep.subr.mxu0 0.0
    %150 = vmatpush1.msra.mxu0 0.0
    %151 = vmatprep.subr.mxu0 0.0
    %152 = vmatpush1.msra.mxu0 0.0
    %153 = vmatprep.subr.mxu0 0.0
    %154 = vmatpush1.msra.mxu0 0.0
    %155 = vmatprep.subr.mxu0 0.0
    %156 = vmatpush1.msra.mxu0 0.0
    %157 = vmatprep.subr.mxu0 0.0
    %158 = vmatpush1.msra.mxu0 0.0
    %159 = vmatprep.subr.mxu0 0.0
    %160 = vmatpush1.msra.mxu0 0.0
    %161 = vmatprep.subr.mxu0 0.0
    %162 = vmatpush1.msra.mxu0 %v123
    %163 = vmatprep.subr.mxu0 0.0
    %164 = vmatpush1.msra.mxu0 %v122
    %165 = vmatprep.subr.mxu0 0.0
    %166 = vmatpush1.msra.mxu0 %v121
    %167 = vmatprep.subr.mxu0 0.0
    %168 = vmatpush2.msra.mxu0 0.0
    %169 = vmatprep.subr.mxu0 0.0
    %170 = vmatpush2.msra.mxu0 0.0
    %171 = vmatprep.subr.mxu0 0.0
    %172 = vmatpush2.msra.mxu0 0.0
    %173 = vmatprep.subr.mxu0 0.0
    %174 = vmatpush2.msra.mxu0 0.0
    %175 = vmatprep.subr.mxu0 0.0
    %176 = vmatpush2.msra.mxu0 0.0
    %177 = vmatprep.subr.mxu0 0.0
    %178 = vmatpush2.msra.mxu0 0.0
    %179 = vmatprep.subr.mxu0 0.0
    %180 = vmatpush2.msra.mxu0 0.0
    %181 = vmatprep.subr.mxu0 0.0
    %182 = vmatpush2.msra.mxu0 0.0
    %183 = vmatprep.subr.mxu0 0.0
    %184 = vmatpush2.msra.mxu0 0.0
    %185 = vmatprep.subr.mxu0 0.0
    %186 = vmatpush2.msra.mxu0 0.0
    %187 = vmatprep.subr.mxu0 0.0
    %188 = vmatpush2.msra.mxu0 0.0
    %189 = vmatprep.subr.mxu0 0.0
    %190 = vmatpush2.msra.mxu0 0.0
    %191 = vmatprep.subr.mxu0 0.0
    %192 = vmatpush2.msra.mxu0 0.0
    %193 = vmatprep.subr.mxu0 0.0
    %194 = vmatpush2.msra.mxu0 0.0
    %195 = vmatprep.subr.mxu0 0.0
    %196 = vmatpush2.msra.mxu0 0.0
    %197 = vmatprep.subr.mxu0 0.0
    %198 = vmatpush2.msra.mxu0 0.0
    %199 = vmatprep.mubr.f32.mxu0 0.0
    %200 = vmatmul.mubr.f32.gmra.mxu0 %v133
    %v201 = vpop.f32.mrf.mxu0
    %v202 = vadd.f32 %v129, %v201
    %v203 = vpop.f32.mrf.mxu0
    %204 = vdwg.mxu0
    %v205 = vmax.f32 %v202, 0.0
    %v206 = vld [vmem:[%s5] sm:$0xff]
    %v207 = vld [vmem:[%s5 + $0x8] sm:$0xff]
    %v208 = vld [vmem:[%s6] sm:$0x1]
    %v210 = vlaneseq
    %v211 = vshrl.u32 %v210, 7
    %v212 = vsub.s32 0, %v211
    %v213 = vrot.slane %v208, %v212
    %vm215 = vcmask 130048
    %v217 = vsel %vm215, %v205, 0
    %219 = vmatprep.subr.mxu0 0.0
    %220 = vmatpush1.msra.mxu0 0.0
    %221 = vmatprep.subr.mxu0 0.0
    %222 = vmatpush1.msra.mxu0 0.0
    %223 = vmatprep.subr.mxu0 0.0
    %224 = vmatpush1.msra.mxu0 0.0
    %225 = vmatprep.subr.mxu0 0.0
    %226 = vmatpush1.msra.mxu0 0.0
    %227 = vmatprep.subr.mxu0 0.0
    %228 = vmatpush1.msra.mxu0 0.0
    %229 = vmatprep.subr.mxu0 0.0
    %230 = vmatpush1.msra.mxu0 0.0
    %231 = vmatprep.subr.mxu0 0.0
    %232 = vmatpush1.msra.mxu0 0.0
    %233 = vmatprep.subr.mxu0 0.0
    %234 = vmatpush1.msra.mxu0 0.0
    %235 = vmatprep.subr.mxu0 0.0
    %236 = vmatpush1.msra.mxu0 0.0
    %237 = vmatprep.subr.mxu0 0.0
    %238 = vmatpush1.msra.mxu0 0.0
    %239 = vmatprep.subr.mxu0 0.0
    %240 = vmatpush1.msra.mxu0 0.0
    %241 = vmatprep.subr.mxu0 0.0
    %242 = vmatpush1.msra.mxu0 0.0
    %243 = vmatprep.subr.mxu0 0.0
    %244 = vmatpush1.msra.mxu0 0.0
    %245 = vmatprep.subr.mxu0 0.0
    %246 = vmatpush1.msra.mxu0 0.0
    %247 = vmatprep.subr.mxu0 0.0
    %248 = vmatpush1.msra.mxu0 %v207
    %249 = vmatprep.subr.mxu0 0.0
    %250 = vmatpush1.msra.mxu0 %v206
    %251 = vmatprep.subr.mxu0 0.0
    %252 = vmatpush2.msra.mxu0 0.0
    %253 = vmatprep.subr.mxu0 0.0
    %254 = vmatpush2.msra.mxu0 0.0
    %255 = vmatprep.subr.mxu0 0.0
    %256 = vmatpush2.msra.mxu0 0.0
    %257 = vmatprep.subr.mxu0 0.0
    %258 = vmatpush2.msra.mxu0 0.0
    %259 = vmatprep.subr.mxu0 0.0
    %260 = vmatpush2.msra.mxu0 0.0
    %261 = vmatprep.subr.mxu0 0.0
    %262 = vmatpush2.msra.mxu0 0.0
    %263 = vmatprep.subr.mxu0 0.0
    %264 = vmatpush2.msra.mxu0 0.0
    %265 = vmatprep.subr.mxu0 0.0
    %266 = vmatpush2.msra.mxu0 0.0
    %267 = vmatprep.subr.mxu0 0.0
    %268 = vmatpush2.msra.mxu0 0.0
    %269 = vmatprep.subr.mxu0 0.0
    %270 = vmatpush2.msra.mxu0 0.0
    %271 = vmatprep.subr.mxu0 0.0
    %272 = vmatpush2.msra.mxu0 0.0
    %273 = vmatprep.subr.mxu0 0.0
    %274 = vmatpush2.msra.mxu0 0.0
    %275 = vmatprep.subr.mxu0 0.0
    %276 = vmatpush2.msra.mxu0 0.0
    %277 = vmatprep.subr.mxu0 0.0
    %278 = vmatpush2.msra.mxu0 0.0
    %279 = vmatprep.subr.mxu0 0.0
    %280 = vmatpush2.msra.mxu0 0.0
    %281 = vmatprep.subr.mxu0 0.0
    %282 = vmatpush2.msra.mxu0 0.0
    %283 = vmatprep.mubr.f32.mxu0 0.0
    %284 = vmatmul.mubr.f32.gmra.mxu0 %v217
    %v285 = vpop.f32.mrf.mxu0
    %v286 = vadd.f32 %v213, %v285
    %v287 = vpop.f32.mrf.mxu0
    %288 = vdwg.mxu0
    %v289 = vmul.f32 %v286, %v286
    %v290 = vadd.f32 %v289, 1e-08
    %291 = vst.msk [vmem:[#allocation4] sm:$0xff] %vm215, %v286
    %293 = vrot.lane.b32.xlu0 %v290, 112
    %v294 = vpop.permute.xlu0 %293
    %296 = vst.msk [vmem:[#allocation6] sm:$0xff] %vm215, %v294
    %v297 = vld [vmem:[%s7] sm:$0x3]
    %v298 = vld [vmem:[%s7 + $0x2] sm:$0x3]
    %v299 = vld [vmem:[%s7 + $0x4] sm:$0x3]
    %v300 = vld [vmem:[%s7 + $0x6] sm:$0x3]
    %v301 = vld [vmem:[%s7 + $0x8] sm:$0x3]
    %v302 = vld [vmem:[%s7 + $0xa] sm:$0x3]
    %v303 = vld [vmem:[%s7 + $0xc] sm:$0x3]
    %v304 = vld [vmem:[%s7 + $0xe] sm:$0x3]
    %v305 = vcombine.high %v290, %v290
    %v307 = vunpack.c.l.s4 1966171168
    %v308 = vunpack.c.0.s8 %v307
    %v309 = vlaneseq
    %v310 = vshrl.u32 %v309, 7
    %v311 = vsub.s32 %v308, %v310
    %v312 = vrot.slane %v290, %v311
    %v314 = vunpack.c.l.s4 1966171168
    %v315 = vunpack.c.0.s8 %v314
    %v316 = vlaneseq
    %v317 = vshrl.u32 %v316, 7
    %v318 = vsub.s32 %v315, %v317
    %v319 = vrot.slane %v305, %v318
    %v320 = vcombine.high %v312, %v312
    %v321 = vcombine.high %v319, %v319
    %v323 = vunpack.c.l.s4 1966171168
    %v324 = vunpack.c.0.s8 %v323
    %v325 = vlaneseq
    %v326 = vshrl.u32 %v325, 7
    %v327 = vsub.s32 %v324, %v326
    %v328 = vrot.slane %v312, %v327
    %v330 = vunpack.c.l.s4 1966171168
    %v331 = vunpack.c.0.s8 %v330
    %v332 = vlaneseq
    %v333 = vshrl.u32 %v332, 7
    %v334 = vsub.s32 %v331, %v333
    %v335 = vrot.slane %v319, %v334
    %v337 = vunpack.c.l.s4 1966171168
    %v338 = vunpack.c.0.s8 %v337
    %v339 = vlaneseq
    %v340 = vshrl.u32 %v339, 7
    %v341 = vsub.s32 %v338, %v340
    %v342 = vrot.slane %v320, %v341
    %v344 = vunpack.c.l.s4 1966171168
    %v345 = vunpack.c.0.s8 %v344
    %v346 = vlaneseq
    %v347 = vshrl.u32 %v346, 7
    %v348 = vsub.s32 %v345, %v347
    %v349 = vrot.slane %v321, %v348
    %v350 = vcombine.high %v328, %v328
    %v351 = vcombine.high %v335, %v335
    %v352 = vcombine.high %v342, %v342
    %v353 = vcombine.high %v349, %v349
    %v354 = vlaneseq
    %v355 = vshrl.u32 %v354, 7
    %v356 = vsub.s32 0, %v355
    %v357 = vrot.slane %v328, %v356
    %v358 = vlaneseq
    %v359 = vshrl.u32 %v358, 7
    %v360 = vsub.s32 0, %v359
    %v361 = vrot.slane %v342, %v360
    %v362 = vlaneseq
    %v363 = vshrl.u32 %v362, 7
    %v364 = vsub.s32 0, %v363
    %v365 = vrot.slane %v350, %v364
    %v366 = vlaneseq
    %v367 = vshrl.u32 %v366, 7
    %v368 = vsub.s32 0, %v367
    %v369 = vrot.slane %v352, %v368
    %v370 = vlaneseq
    %v371 = vshrl.u32 %v370, 7
    %v372 = vsub.s32 0, %v371
    %v373 = vrot.slane %v335, %v372
    %v374 = vlaneseq
    %v375 = vshrl.u32 %v374, 7
    %v376 = vsub.s32 0, %v375
    %v377 = vrot.slane %v349, %v376
    %v378 = vlaneseq
    %v379 = vshrl.u32 %v378, 7
    %v380 = vsub.s32 0, %v379
    %v381 = vrot.slane %v351, %v380
    %v382 = vlaneseq
    %v383 = vshrl.u32 %v382, 7
    %v384 = vsub.s32 0, %v383
    %v385 = vrot.slane %v353, %v384
    %402 = vrot.lane.b32.xlu0 %v297, 16
    %v403 = vpop.permute.xlu0 %402
    %404 = vrot.lane.b32.xlu0 %v298, 16
    %v405 = vpop.permute.xlu0 %404
    %406 = vrot.lane.b32.xlu0 %v299, 16
    %v407 = vpop.permute.xlu0 %406
    %408 = vrot.lane.b32.xlu0 %v300, 16
    %v409 = vpop.permute.xlu0 %408
    %410 = vrot.lane.b32.xlu0 %v301, 16
    %v411 = vpop.permute.xlu0 %410
    %412 = vrot.lane.b32.xlu0 %v302, 16
    %v413 = vpop.permute.xlu0 %412
    %414 = vrot.lane.b32.xlu0 %v303, 16
    %v415 = vpop.permute.xlu0 %414
    %416 = vrot.lane.b32.xlu0 %v304, 16
    %v417 = vpop.permute.xlu0 %416
    %v426 = vmul.f32 %v357, %v403
    %v427 = vmul.f32 %v361, %v405
    %v428 = vmul.f32 %v365, %v407
    %v429 = vmul.f32 %v369, %v409
    %v430 = vmul.f32 %v373, %v411
    %v431 = vmul.f32 %v377, %v413
    %v432 = vmul.f32 %v381, %v415
    %v433 = vmul.f32 %v385, %v417
    %v435 = vcombine.high %v286, %v286
    %v437 = vunpack.c.l.s4 1966171168
    %v438 = vunpack.c.0.s8 %v437
    %v439 = vlaneseq
    %v440 = vshrl.u32 %v439, 7
    %v441 = vsub.s32 %v438, %v440
    %v442 = vrot.slane %v286, %v441
    %v444 = vunpack.c.l.s4 1966171168
    %v445 = vunpack.c.0.s8 %v444
    %v446 = vlaneseq
    %v447 = vshrl.u32 %v446, 7
    %v448 = vsub.s32 %v445, %v447
    %v449 = vrot.slane %v435, %v448
    %v450 = vcombine.high %v442, %v442
    %v451 = vcombine.high %v449, %v449
    %v453 = vunpack.c.l.s4 1966171168
    %v454 = vunpack.c.0.s8 %v453
    %v455 = vlaneseq
    %v456 = vshrl.u32 %v455, 7
    %v457 = vsub.s32 %v454, %v456
    %v458 = vrot.slane %v442, %v457
    %v460 = vunpack.c.l.s4 1966171168
    %v461 = vunpack.c.0.s8 %v460
    %v462 = vlaneseq
    %v463 = vshrl.u32 %v462, 7
    %v464 = vsub.s32 %v461, %v463
    %v465 = vrot.slane %v449, %v464
    %v467 = vunpack.c.l.s4 1966171168
    %v468 = vunpack.c.0.s8 %v467
    %v469 = vlaneseq
    %v470 = vshrl.u32 %v469, 7
    %v471 = vsub.s32 %v468, %v470
    %v472 = vrot.slane %v450, %v471
    %v474 = vunpack.c.l.s4 1966171168
    %v475 = vunpack.c.0.s8 %v474
    %v476 = vlaneseq
    %v477 = vshrl.u32 %v476, 7
    %v478 = vsub.s32 %v475, %v477
    %v479 = vrot.slane %v451, %v478
    %v480 = vcombine.high %v458, %v458
    %v481 = vcombine.high %v465, %v465
    %v482 = vcombine.high %v472, %v472
    %v483 = vcombine.high %v479, %v479
    %v484 = vlaneseq
    %v485 = vshrl.u32 %v484, 7
    %v486 = vsub.s32 0, %v485
    %v487 = vrot.slane %v458, %v486
    %v488 = vlaneseq
    %v489 = vshrl.u32 %v488, 7
    %v490 = vsub.s32 0, %v489
    %v491 = vrot.slane %v472, %v490
    %v492 = vlaneseq
    %v493 = vshrl.u32 %v492, 7
    %v494 = vsub.s32 0, %v493
    %v495 = vrot.slane %v480, %v494
    %v496 = vlaneseq
    %v497 = vshrl.u32 %v496, 7
    %v498 = vsub.s32 0, %v497
    %v499 = vrot.slane %v482, %v498
    %v500 = vlaneseq
    %v501 = vshrl.u32 %v500, 7
    %v502 = vsub.s32 0, %v501
    %v503 = vrot.slane %v465, %v502
    %v504 = vlaneseq
    %v505 = vshrl.u32 %v504, 7
    %v506 = vsub.s32 0, %v505
    %v507 = vrot.slane %v479, %v506
    %v508 = vlaneseq
    %v509 = vshrl.u32 %v508, 7
    %v510 = vsub.s32 0, %v509
    %v511 = vrot.slane %v481, %v510
    %v512 = vlaneseq
    %v513 = vshrl.u32 %v512, 7
    %v514 = vsub.s32 0, %v513
    %v515 = vrot.slane %v483, %v514
    %516 = vrot.lane.b32.xlu0 %v487, 16
    %v517 = vpop.permute.xlu0 %516
    %518 = vrot.lane.b32.xlu0 %v491, 16
    %v519 = vpop.permute.xlu0 %518
    %520 = vrot.lane.b32.xlu0 %v495, 16
    %v521 = vpop.permute.xlu0 %520
    %522 = vrot.lane.b32.xlu0 %v499, 16
    %v523 = vpop.permute.xlu0 %522
    %524 = vrot.lane.b32.xlu0 %v503, 16
    %v525 = vpop.permute.xlu0 %524
    %526 = vrot.lane.b32.xlu0 %v507, 16
    %v527 = vpop.permute.xlu0 %526
    %528 = vrot.lane.b32.xlu0 %v511, 16
    %v529 = vpop.permute.xlu0 %528
    %530 = vrot.lane.b32.xlu0 %v515, 16
    %v531 = vpop.permute.xlu0 %530
    %v540 = vadd.f32 %v426, %v517
    %v541 = vadd.f32 %v427, %v519
    %v542 = vadd.f32 %v428, %v521
    %v543 = vadd.f32 %v429, %v523
    %v544 = vadd.f32 %v430, %v525
    %v545 = vadd.f32 %v431, %v527
    %v546 = vadd.f32 %v432, %v529
    %v547 = vadd.f32 %v433, %v531
    %556 = vrot.lane.b32.xlu0 %v540, 112
    %v557 = vpop.permute.xlu0 %556
    %558 = vrot.lane.b32.xlu0 %v541, 112
    %v559 = vpop.permute.xlu0 %558
    %560 = vrot.lane.b32.xlu0 %v542, 112
    %v561 = vpop.permute.xlu0 %560
    %562 = vrot.lane.b32.xlu0 %v543, 112
    %v563 = vpop.permute.xlu0 %562
    %564 = vrot.lane.b32.xlu0 %v544, 112
    %v565 = vpop.permute.xlu0 %564
    %566 = vrot.lane.b32.xlu0 %v545, 112
    %v567 = vpop.permute.xlu0 %566
    %568 = vrot.lane.b32.xlu0 %v546, 112
    %v569 = vpop.permute.xlu0 %568
    %570 = vrot.lane.b32.xlu0 %v547, 112
    %v571 = vpop.permute.xlu0 %570
    %vm580 = vcmask 123904
    %581 = vst.msk [vmem:[#allocation2] sm:$0x3] %vm580, %v557
    %582 = vst.msk [vmem:[#allocation2 + $0x2] sm:$0x3] %vm580, %v559
    %583 = vst.msk [vmem:[#allocation2 + $0x4] sm:$0x3] %vm580, %v561
    %584 = vst.msk [vmem:[#allocation2 + $0x6] sm:$0x3] %vm580, %v563
    %585 = vst.msk [vmem:[#allocation2 + $0x8] sm:$0x3] %vm580, %v565
    %586 = vst.msk [vmem:[#allocation2 + $0xa] sm:$0x3] %vm580, %v567
    %587 = vst.msk [vmem:[#allocation2 + $0xc] sm:$0x3] %vm580, %v569
    %588 = vst.msk [vmem:[#allocation2 + $0xe] sm:$0x3] %vm580, %v571
    // Predicated region
    $region34: #{tpu_custom_call.1} parent=1 // pred_check
      _
    $region35: #{tpu_custom_call.1} parent=1 // pred_check_branch
      %590 = sbr.rel (0) target = $region37
    $region36: #{tpu_custom_call.1} parent=1 // pred_region
      %s592 = ssub.s32 256, 256
      %593 = vsyncadd [#allocation3], %s592
      %s594 = sshll.u32 [#allocation2], 4
      %s595 = int_to_ptr.vmem [resolvable:$true] %s594
      %600 = dma.vmem_to_hbm [thread:$0]  %s595, 256, %s8, [#allocation3], 32, 32, 2
    $region37: #{tpu_custom_call.1} parent=1 // pred_fallthru
      _
    // Predicated region
    $region38: #{tpu_custom_call.1} parent=1 // pred_check
      _
    $region39: #{tpu_custom_call.1} parent=1 // pred_check_branch
      %602 = sbr.rel (0) target = $region41
    $region40: #{tpu_custom_call.1} parent=1 // pred_region
      %s604 = ssub.s32 128, 128
      %605 = vsyncadd [#allocation5], %s604
      %s607 = sshll.u32 [#allocation4], 4
      %s608 = int_to_ptr.vmem [resolvable:$true] %s607
      %610 = dma.vmem_to_hbm [thread:$0]  %s608, 128, %s9, [#allocation5]
    $region41: #{tpu_custom_call.1} parent=1 // pred_fallthru
      _
    // Predicated region
    $region42: #{tpu_custom_call.1} parent=1 // pred_check
      _
    $region43: #{tpu_custom_call.1} parent=1 // pred_check_branch
      %612 = sbr.rel (0) target = $region45
    $region44: #{tpu_custom_call.1} parent=1 // pred_region
      %s614 = ssub.s32 128, 128
      %615 = vsyncadd [#allocation5], %s614
      %s617 = sshll.u32 [#allocation6], 4
      %s618 = int_to_ptr.vmem [resolvable:$true] %s617
      %620 = dma.vmem_to_hbm [thread:$0]  %s618, 128, %s10, [#allocation5]
    $region45: #{tpu_custom_call.1} parent=1 // pred_fallthru
      _
    // Predicated region
    $region46: #{tpu_custom_call.1} parent=1 // pred_check
      _
    $region47: #{tpu_custom_call.1} parent=1 // pred_check_branch
      %622 = sbr.rel (0) target = $region49
    $region48: #{tpu_custom_call.1} parent=1 // pred_region
      %623 = dma.done [#allocation3], 256
    $region49: #{tpu_custom_call.1} parent=1 // pred_fallthru
      _
    // Predicated region
    $region50: #{tpu_custom_call.1} parent=1 // pred_check
      _
    $region51: #{tpu_custom_call.1} parent=1 // pred_check_branch
      %625 = sbr.rel (0) target = $region53
    $region52: #{tpu_custom_call.1} parent=1 // pred_region
      %626 = dma.done [#allocation5], 128
    $region53: #{tpu_custom_call.1} parent=1 // pred_fallthru
      _
    // Predicated region
    $region54: #{tpu_custom_call.1} parent=1 // pred_check
      _
    $region55: #{tpu_custom_call.1} parent=1 // pred_check_branch
      %628 = sbr.rel (0) target = $region57
    $region56: #{tpu_custom_call.1} parent=1 // pred_region
      %629 = dma.done [#allocation5], 128
    $region57: #{tpu_custom_call.1} parent=1 // pred_fallthru
      _
    %630 = vsyncpa [#allocation3], 1
    %631 = vsyncpa [#allocation5], 1

</llo_original>
